<compile_context>
chip_gen: v7x
topology: tpu7x:2x2x1
jax: 0.10.0
libtpu: 0.0.40
codegen_flags: <defaults>
</compile_context>

<pallas_src>
import functools
import math

import jax
import jax.numpy as jnp
from jax.experimental import pallas as pl
from jax.experimental.pallas import tpu as pltpu

_LANE = 128
_MIN_GRID_STEPS = 8      # >= 4 steps per TensorCore on v7x's 2-TC megacore
_MAX_PACKED_W = 512      # cap on folded lane width (keeps MXU work hidden)


def _cdiv(a, b):
    return -(-a // b)


@functools.lru_cache(maxsize=None)
def _hw_params():
    """Generation-dependent (target_block_bytes, vmem_limit_bytes, small_mxu)."""
    kind = ""
    try:
        kind = jax.devices()[0].device_kind.lower()
    except Exception:
        pass
    vmem_cap = None
    try:
        vmem_cap = getattr(pltpu.get_tpu_info(), "vmem_capacity_bytes", None)
    except Exception:
        vmem_cap = None
    if vmem_cap is None:
        vmem_cap = (64 << 20) if "v7" in kind else (128 << 20)
    # v2-v5 class chips have much smaller MXU throughput than v6e/v7x.
    small_mxu = any(g in kind for g in ("v2", "v3", "v4", "v5"))
    if vmem_cap >= (100 << 20):          # v5e/v6e: 128 MiB physical VMEM
        return (4 << 20), (96 << 20), small_mxu
    return (2 << 20), (48 << 20), small_mxu   # v7x: 64 MiB per TensorCore


def _ln_kernel(x_ref, w_ref, b_ref, o_ref):
    """Standard path: per-row LayerNorm, reduction over the lane axis."""
    x = x_ref[...].astype(jnp.float32)
    mu = jnp.mean(x, axis=-1, keepdims=True)
    xm = x - mu                                        # reused for var and output
    var = jnp.mean(xm * xm, axis=-1, keepdims=True)    # population variance
    y = xm * jax.lax.rsqrt(var + 1e-5)
    y = y * w_ref[...].astype(jnp.float32) + b_ref[...].astype(jnp.float32)
    o_ref[...] = y.astype(o_ref.dtype)


def _split_bf16(v):
    """hi/lo bf16 split: v ~= hi + lo keeps ~16 mantissa bits through bf16 dots."""
    hi = v.astype(jnp.bfloat16)
    lo = (v - hi.astype(jnp.float32)).astype(jnp.bfloat16)
    return hi, lo


def _ln_packed_kernel(x_ref, w_ref, b_ref, p_ref, o_ref, *, inv_c, split_input):
    """Lane-packed path: each packed row holds k original rows side by side.

    p_ref is a (W, W) block-diagonal 0/1 matrix; x @ p gives every lane the sum
    over its own segment (its original row), already broadcast across the
    segment's lanes."""
    x = x_ref[...].astype(jnp.float32)     # (tile, W)
    p = p_ref[...]                         # (W, W) bf16, entries {0, 1}
    if split_input:
        xh, xl = _split_bf16(x)
        s = (jnp.dot(xh, p, preferred_element_type=jnp.float32)
             + jnp.dot(xl, p, preferred_element_type=jnp.float32))
    else:                                  # bf16 input is exact in bf16
        s = jnp.dot(x_ref[...], p, preferred_element_type=jnp.float32)
    mu = s * inv_c
    xm = x - mu
    v = xm * xm
    if o_ref.dtype == jnp.bfloat16:
        # bf16 output: single bf16 variance dot; ~2^-9 relative error in var is
        # below bf16 output quantization.  Saves one MXU pass + VALU casts.
        var = jnp.dot(v.astype(jnp.bfloat16), p,
                      preferred_element_type=jnp.float32) * inv_c
    else:
        vh, vl = _split_bf16(v)
        var = (jnp.dot(vh, p, preferred_element_type=jnp.float32)
               + jnp.dot(vl, p, preferred_element_type=jnp.float32)) * inv_c
    y = xm * jax.lax.rsqrt(var + 1e-5)
    y = y * w_ref[...].astype(jnp.float32) + b_ref[...].astype(jnp.float32)
    o_ref[...] = y.astype(o_ref.dtype)


def _pick_tile(rows_p, W, io_bytes, f32_temps, target_block, vmem_limit):
    """Row-tile size: big blocks, honest VMEM budget, >= _MIN_GRID_STEPS steps."""
    align = max(8, 32 // io_bytes)                    # f32->8, bf16->16, int8->32
    per_row = 4 * W * io_bytes + f32_temps * W * 4    # dbl-buffered io + f32 temps
    budget = (vmem_limit * 3) // 4                    # headroom for w/b/p + scratch
    if per_row > budget:
        # TODO(synk): a single row larger than the VMEM budget would need a
        # split-C two-pass reduction kernel; not needed for this module's dims.
        return min(rows_p, align)
    t = min(budget // per_row, max(1, target_block // (W * io_bytes)))
    # Keep enough grid depth for DMA/compute overlap and even TC split on v7x.
    t = min(t, max(align, rows_p // _MIN_GRID_STEPS))
    t = max(align, (t // align) * align)              # sublane-aligned tiles
    if t >= rows_p:
        return rows_p                                 # block == full dim is legal
    steps = _cdiv(rows_p, t)
    if steps % 2 == 1:                                # prefer even #steps (2 TCs)
        t2 = _cdiv(_cdiv(rows_p, steps + 1), align) * align
        if 0 < t2 <= t and _cdiv(rows_p, t2) % 2 == 0:
            t = t2
    return t


def _pack_factor(rows, C, small_mxu):
    """Fold k consecutive rows into the lane dim; returns (k, W=k*C)."""
    if C <= 0 or C % _LANE == 0:
        return 1, C                            # already lane-dense (or degenerate)
    if C < _LANE and _LANE % C == 0:
        k = _LANE // C                         # classic small-C case: W = 128
        if rows % k == 0:
            return k, k * C
        return 1, C
    if small_mxu:
        return 1, C                            # v5e: wide contractions hit MXU roofline
    k = _LANE // math.gcd(C, _LANE)            # smallest k with k*C % 128 == 0
    W = k * C
    if k > 1 and W <= _MAX_PACKED_W and rows % k == 0:
        return k, W
    return 1, C


def withbias_layernorm(x, weight, bias):
    """x: (..., C). Normalizes over the last dim; affine weight/bias of shape (C,)."""
    orig_shape = x.shape
    C = orig_shape[-1]
    rows = math.prod(orig_shape[:-1]) if len(orig_shape) > 1 else 1
    io_bytes = x.dtype.itemsize

    target_block, vmem_limit, small_mxu = _hw_params()

    k, W = _pack_factor(rows, C, small_mxu)
    rows_p = rows // k
    x2 = x.reshape(rows_p, W)                          # free row-major view
    w2 = jnp.tile(jnp.reshape(weight, (1, C)), (1, k))
    b2 = jnp.tile(jnp.reshape(bias, (1, C)), (1, k))

    f32_temps = 3 if k == 1 else 4
    tile = _pick_tile(rows_p, W, io_bytes, f32_temps, target_block, vmem_limit)
    grid = (_cdiv(rows_p, tile),)                      # ragged last block, no padding

    row_spec = pl.BlockSpec((tile, W), lambda i: (i, 0))
    vec_spec = pl.BlockSpec((1, W), lambda i: (0, 0))

    if k > 1:
        seg = jnp.arange(W, dtype=jnp.int32) // C
        p = (seg[:, None] == seg[None, :]).astype(jnp.bfloat16)
        kernel = functools.partial(
            _ln_packed_kernel,
            inv_c=1.0 / C,
            split_input=(x.dtype != jnp.bfloat16))
        in_specs = [row_spec, vec_spec, vec_spec,
                    pl.BlockSpec((W, W), lambda i: (0, 0))]
        args = (x2, w2, b2, p)
    else:
        kernel = _ln_kernel
        in_specs = [row_spec, vec_spec, vec_spec]
        args = (x2, w2, b2)

    out = pl.pallas_call(
        kernel,
        out_shape=jax.ShapeDtypeStruct((rows_p, W), x.dtype),
        grid_spec=pltpu.PrefetchScalarGridSpec(
            num_scalar_prefetch=0,
            grid=grid,
            in_specs=in_specs,
            out_specs=row_spec,
        ),
        compiler_params=pltpu.CompilerParams(
            dimension_semantics=("parallel",),
            vmem_limit_bytes=vmem_limit,
        ),
    )(*args)
    return out.reshape(orig_shape)


def _reference(x, weight, bias):
    x = x.astype(jnp.float32)
    mu = jnp.mean(x, axis=-1, keepdims=True)
    var = jnp.mean((x - mu) ** 2, axis=-1, keepdims=True)
    return (x - mu) / jnp.sqrt(var + 1e-5) * weight.astype(jnp.float32) \
        + bias.astype(jnp.float32)


if __name__ == "__main__":
    key = jax.random.PRNGKey(0)
    k1, k2, k3, k4, k5 = jax.random.split(key, 5)

    # Case 1: Ufuser usage -- LN applied to to_3d(x): (B, H*W, C) with small C.
    # Exercises the lane-packed path (4 rows folded into 128 lanes) and a ragged
    # final grid block.
    B, HW, C = 2, 72, 32
    x = jax.random.normal(k1, (B, HW, C), dtype=jnp.float32)
    weight = jnp.ones((C,), jnp.float32)   # module __init__: weight = ones, bias = zeros
    bias = jnp.zeros((C,), jnp.float32)
    out = jax.block_until_ready(withbias_layernorm(x, weight, bias))
    ref = _reference(x, weight, bias)
    assert out.shape == x.shape and out.dtype == x.dtype
    assert jnp.allclose(out, ref, atol=1e-4, rtol=1e-4), \
        float(jnp.max(jnp.abs(out - ref)))

    # Case 2: C = 192 (>= 128, not a multiple of 128) with non-trivial affine.
    # Standard lane-reduction path on v5e-class chips; lane-dense fold (k=2,
    # W=384) on v6e/v7x.
    x2 = jax.random.normal(k2, (2, 64, 192), dtype=jnp.float32)
    w2 = 1.0 + 0.1 * jax.random.normal(k3, (192,), dtype=jnp.float32)
    b2 = 0.1 * jax.random.normal(k4, (192,), dtype=jnp.float32)
    out2 = jax.block_until_ready(withbias_layernorm(x2, w2, b2))
    ref2 = _reference(x2, w2, b2)
    assert jnp.allclose(out2, ref2, atol=1e-4, rtol=1e-4), \
        float(jnp.max(jnp.abs(out2 - ref2)))

    # Case 3: bf16 activations (HBM I/O stays bf16; f32 compute in-kernel;
    # single-dot bf16 variance path).
    x3 = jax.random.normal(k5, (2, 64, 64), dtype=jnp.bfloat16)
    w3 = jnp.ones((64,), jnp.float32)
    b3 = jnp.zeros((64,), jnp.float32)
    out3 = jax.block_until_ready(withbias_layernorm(x3, w3, b3))
    ref3 = _reference(x3, w3, b3)
    assert out3.dtype == jnp.bfloat16
    assert jnp.allclose(out3.astype(jnp.float32), ref3, atol=2e-2, rtol=2e-2)

    print("KERNEL_OK")
</pallas_src>

<mosaic_0001>
module attributes {stable_mosaic.version = 11 : i64} {
  func.func @_ln_packed_kernel(%arg0: i32, %arg1: memref<8x128xf32, #tpu.memory_space<vmem>>, %arg2: memref<1x128xf32, #tpu.memory_space<vmem>>, %arg3: memref<1x128xf32, #tpu.memory_space<vmem>>, %arg4: memref<128x128xbf16, #tpu.memory_space<vmem>>, %arg5: memref<8x128xf32, #tpu.memory_space<vmem>>) attributes {dimension_semantics = [#tpu.dimension_semantics<parallel>], iteration_bounds = array<i64: 5>, scalar_prefetch = 0 : i64, scratch_operands = 0 : i64, tpu.core_type = #tpu.core_type<tc>, window_params = [{transform_indices = @transform_0, window_bounds = array<i64: 8, 128>}, {pipeline_mode = #tpu.pipeline_mode<synchronous>, transform_indices = @transform_1, window_bounds = array<i64: 1, 128>}, {pipeline_mode = #tpu.pipeline_mode<synchronous>, transform_indices = @transform_2, window_bounds = array<i64: 1, 128>}, {pipeline_mode = #tpu.pipeline_mode<synchronous>, transform_indices = @transform_3, window_bounds = array<i64: 128, 128>}, {transform_indices = @transform_4, window_bounds = array<i64: 8, 128>}]} {
    %c0 = arith.constant 0 : index
    %c0_0 = arith.constant 0 : index
    %0 = vector.load %arg1[%c0, %c0_0] : memref<8x128xf32, #tpu.memory_space<vmem>>, vector<8x128xf32>
    %c0_1 = arith.constant 0 : index
    %c0_2 = arith.constant 0 : index
    %1 = vector.load %arg4[%c0_1, %c0_2] : memref<128x128xbf16, #tpu.memory_space<vmem>>, vector<128x128xbf16>
    %2 = arith.truncf %0 : vector<8x128xf32> to vector<8x128xbf16>
    %3 = arith.extf %2 : vector<8x128xbf16> to vector<8x128xf32>
    %4 = arith.subf %0, %3 : vector<8x128xf32>
    %5 = arith.truncf %4 : vector<8x128xf32> to vector<8x128xbf16>
    %cst = arith.constant dense<0.000000e+00> : vector<8x128xf32>
    %6 = tpu.matmul %2, %1, %cst {dimension_numbers = #tpu.dot_dimension_numbers<[1], [0], [0], [1], [0, 0, 1, 1], [], []>} : vector<8x128xbf16>, vector<128x128xbf16>, vector<8x128xf32> -> vector<8x128xf32>
    %cst_3 = arith.constant dense<0.000000e+00> : vector<8x128xf32>
    %7 = tpu.matmul %5, %1, %cst_3 {dimension_numbers = #tpu.dot_dimension_numbers<[1], [0], [0], [1], [0, 0, 1, 1], [], []>} : vector<8x128xbf16>, vector<128x128xbf16>, vector<8x128xf32> -> vector<8x128xf32>
    %8 = arith.addf %6, %7 : vector<8x128xf32>
    %cst_4 = arith.constant 3.125000e-02 : f32
    %9 = vector.broadcast %cst_4 : f32 to vector<8x128xf32>
    %10 = arith.mulf %8, %9 : vector<8x128xf32>
    %11 = arith.subf %0, %10 : vector<8x128xf32>
    %12 = arith.mulf %11, %11 : vector<8x128xf32>
    %13 = arith.truncf %12 : vector<8x128xf32> to vector<8x128xbf16>
    %14 = arith.extf %13 : vector<8x128xbf16> to vector<8x128xf32>
    %15 = arith.subf %12, %14 : vector<8x128xf32>
    %16 = arith.truncf %15 : vector<8x128xf32> to vector<8x128xbf16>
    %cst_5 = arith.constant dense<0.000000e+00> : vector<8x128xf32>
    %17 = tpu.matmul %13, %1, %cst_5 {dimension_numbers = #tpu.dot_dimension_numbers<[1], [0], [0], [1], [0, 0, 1, 1], [], []>} : vector<8x128xbf16>, vector<128x128xbf16>, vector<8x128xf32> -> vector<8x128xf32>
    %cst_6 = arith.constant dense<0.000000e+00> : vector<8x128xf32>
    %18 = tpu.matmul %16, %1, %cst_6 {dimension_numbers = #tpu.dot_dimension_numbers<[1], [0], [0], [1], [0, 0, 1, 1], [], []>} : vector<8x128xbf16>, vector<128x128xbf16>, vector<8x128xf32> -> vector<8x128xf32>
    %19 = arith.addf %17, %18 : vector<8x128xf32>
    %cst_7 = arith.constant 3.125000e-02 : f32
    %20 = vector.broadcast %cst_7 : f32 to vector<8x128xf32>
    %21 = arith.mulf %19, %20 : vector<8x128xf32>
    %cst_8 = arith.constant 9.99999974E-6 : f32
    %22 = vector.broadcast %cst_8 : f32 to vector<8x128xf32>
    %23 = arith.addf %21, %22 : vector<8x128xf32>
    %24 = math.rsqrt %23 : vector<8x128xf32>
    %25 = arith.mulf %11, %24 : vector<8x128xf32>
    %c0_9 = arith.constant 0 : index
    %c0_10 = arith.constant 0 : index
    %26 = vector.load %arg2[%c0_9, %c0_10] : memref<1x128xf32, #tpu.memory_space<vmem>>, vector<1x128xf32>
    %27 = vector.broadcast %26 : vector<1x128xf32> to vector<8x128xf32>
    %28 = arith.mulf %25, %27 : vector<8x128xf32>
    %c0_11 = arith.constant 0 : index
    %c0_12 = arith.constant 0 : index
    %29 = vector.load %arg3[%c0_11, %c0_12] : memref<1x128xf32, #tpu.memory_space<vmem>>, vector<1x128xf32>
    %30 = vector.broadcast %29 : vector<1x128xf32> to vector<8x128xf32>
    %31 = arith.addf %28, %30 : vector<8x128xf32>
    %c0_13 = arith.constant 0 : index
    %c0_14 = arith.constant 0 : index
    %32 = vector.load %arg5[%c0_13, %c0_14] : memref<8x128xf32, #tpu.memory_space<vmem>>, vector<8x128xf32>
    tpu.vector_store %arg5[%c0_13, %c0_14], %31 {strides = array<i32>} : memref<8x128xf32, #tpu.memory_space<vmem>>, vector<8x128xf32>,
    return
  }
  func.func @transform_0(%arg0: i32) -> (i32, i32) {
    %c0_i32 = arith.constant 0 : i32
    %c0_i32_0 = arith.constant 0 : i32
    return %arg0, %c0_i32 : i32, i32
  }
  func.func @transform_1(%arg0: i32) -> (i32, i32) {
    %c0_i32 = arith.constant 0 : i32
    %c0_i32_0 = arith.constant 0 : i32
    %c0_i32_1 = arith.constant 0 : i32
    return %c0_i32, %c0_i32_0 : i32, i32
  }
  func.func @transform_2(%arg0: i32) -> (i32, i32) {
    %c0_i32 = arith.constant 0 : i32
    %c0_i32_0 = arith.constant 0 : i32
    %c0_i32_1 = arith.constant 0 : i32
    return %c0_i32, %c0_i32_0 : i32, i32
  }
  func.func @transform_3(%arg0: i32) -> (i32, i32) {
    %c0_i32 = arith.constant 0 : i32
    %c0_i32_0 = arith.constant 0 : i32
    %c0_i32_1 = arith.constant 0 : i32
    return %c0_i32, %c0_i32_0 : i32, i32
  }
  func.func @transform_4(%arg0: i32) -> (i32, i32) {
    %c0_i32 = arith.constant 0 : i32
    %c0_i32_0 = arith.constant 0 : i32
    return %arg0, %c0_i32 : i32, i32
  }
}

</mosaic_0001>

<llo_original>
// kernel: tpu_custom_call.1
$region0: #{tpu_custom_call.1}
  #allocation0 [shape = 'u32[]', space=smem, size = 0x4, offset = 0x4, fixed_abs, tag = 'smem constant byte address 0x4 - core index']
  #allocation1 [shape = 'u32[144,128]{1,0:T(1,128)}', space=vmem, size = 0x12000, scoped, tag = 'internal scratch']
  %s0 = inlined_call_operand.hbm [shape: f32[36,128], index: 0, kind: input, shape index: {}]
  %s1 = inlined_call_operand.hbm [shape: f32[1,128], index: 1, kind: input, shape index: {}]
  %s2 = inlined_call_operand.hbm [shape: f32[1,128], index: 2, kind: input, shape index: {}]
  %s3 = inlined_call_operand.hbm [shape: bf16[128,128], index: 3, kind: input, shape index: {}]
  %s4 = inlined_call_operand.hbm [shape: f32[36,128], index: 4, kind: output, shape index: {}]
  %s5 = sld [smem:[#allocation0]]
  $region65: #{tpu_custom_call.1} parent=0
    _
  %s7 = ssub.s32 1, %s5
  %s8 = scalar_select 0, %s7, %s5
  $region1: #{tpu_custom_call.1} parent=0
    #allocation2 [shape = 'u8[8192]{0}', space=vmem, size = 0x2000, scoped, tag = 'input window, operand 0']
    #allocation3 [shape = 's32[2]{0}', space=sflag, size = 0x8, scoped, tag = 'scoped memory for tpu_custom_call.1']
    #allocation4 [shape = 's32[2]{0}', space=sflag, size = 0x8, scoped, tag = 'scoped memory for tpu_custom_call.1']
    #allocation5 [shape = 'u8[512]{0}', space=vmem, size = 0x400, scoped, tag = 'input window, operand 1, single buffered']
    #allocation6 [shape = 's32[1]{0}', space=sflag, size = 0x4, scoped, tag = 'scoped memory for tpu_custom_call.1']
    #allocation7 [shape = 'u8[512]{0}', space=vmem, size = 0x400, scoped, tag = 'input window, operand 2, single buffered']
    #allocation8 [shape = 'u8[32768]{0}', space=vmem, size = 0x8000, scoped, tag = 'input window, operand 3, single buffered']
    #allocation9 [shape = 's32[1]{0}', space=sflag, size = 0x4, scoped, tag = 'scoped memory for tpu_custom_call.1']
    #allocation10 [shape = 'u8[8192]{0}', space=vmem, size = 0x2000, scoped, tag = 'output window, operand 0']
    %9 = vsyncpa [#allocation3], 0
    %s10 = scalar_lea.sflag [#allocation3], 1
    %11 = vsyncpa %s10, 0
    %12 = vsyncpa [#allocation6], 0
    %13 = vsyncpa [#allocation9], 0
    %14 = vsyncpa [#allocation4], 0
    %s15 = scalar_lea.sflag [#allocation4], 1
    %16 = vsyncpa %s15, 0
    loop: start=0, step=1, limit=7
    $region2: #{tpu_custom_call.1} parent=1 // loop_pre_header
      _
    $region3: #{tpu_custom_call.1} parent=1 // loop_header
      %s18 = sphi 0, %s22
      %p19 = scmp.ge.s32.totalorder %s18, 7
      %s28 = sphi 0, %s30
      %s31 = sphi 0, %s28
      %s32 = sphi 0, %s31
      %s48 = sphi 0, %s32
      %s52 = sphi 0, %s52
      %s54 = sphi 0, %s52
      %s55 = sphi 0, %s54
      %s69 = sphi 0, %s55
      %s73 = sphi 0, %s73
      %s75 = sphi 0, %s73
      %s76 = sphi 0, %s75
      %s90 = sphi 0, %s76
      %s94 = sphi 0, %s94
      %s96 = sphi 0, %s94
      %s97 = sphi 0, %s96
      %s111 = sphi 0, %s97
      %s117 = sphi 0, %s119
      %s120 = sphi 0, %s117
      %s121 = sphi 0, %s120
      %s137 = sphi 0, %s121
    $region4: #{tpu_custom_call.1} parent=1 // loop_header_branch
      %21 = sbr.rel (%p19) target = $region8
    $region5: #{tpu_custom_call.1} parent=1 // loop_body
      %s23 = ssub.s32 %s18, 1
      %s24 = ssub.s32 %s18, 2
      %s25 = sadd.s32 %s18, 1
      %s26 = ssub.s32 %s18, %s25
      %p27 = scmp.eq.s32.totalorder %s26, 0
      %s29 = sadd.s32 %s28, 1
      %s30 = scalar_select %p27, %s28, %s29
      %p33 = pneg %p27
      %p34 = scmp.eq.s32.totalorder %s18, 4
      %p35 = por %p33, %p34
      %p36 = scmp.ne.s32.totalorder %s28, %s31
      %p37 = scmp.eq.s32.totalorder %s18, 0
      %p38 = por %p36, %p37
      %p39 = scmp.ne.s32.totalorder %s28, %s31
      %p40 = scmp.eq.s32.totalorder %s23, 4
      %p41 = por %p39, %p40
      %p42 = scmp.ne.s32.totalorder %s31, %s32
      %p43 = scmp.eq.s32.totalorder %s23, 0
      %p44 = por %p42, %p43
      %p45 = scmp.ne.s32.totalorder %s31, %s32
      %p46 = scmp.eq.s32.totalorder %s24, 4
      %p47 = por %p45, %p46
      %p49 = scmp.ne.s32.totalorder %s32, %s48
      %p50 = scmp.eq.s32.totalorder %s24, 0
      %p51 = por %p49, %p50
      %s53 = sadd.s32 %s52, 1
      %p56 = scmp.eq.s32.totalorder %s18, 4
      %p57 = scmp.ne.s32.totalorder %s52, %s54
      %p58 = scmp.eq.s32.totalorder %s18, 0
      %p59 = por %p57, %p58
      %p60 = scmp.ne.s32.totalorder %s52, %s54
      %p61 = scmp.eq.s32.totalorder %s23, 4
      %p62 = por %p60, %p61
      %p63 = scmp.ne.s32.totalorder %s54, %s55
      %p64 = scmp.eq.s32.totalorder %s23, 0
      %p65 = por %p63, %p64
      %p66 = scmp.ne.s32.totalorder %s54, %s55
      %p67 = scmp.eq.s32.totalorder %s24, 4
      %p68 = por %p66, %p67
      %p70 = scmp.ne.s32.totalorder %s55, %s69
      %p71 = scmp.eq.s32.totalorder %s24, 0
      %p72 = por %p70, %p71
      %s74 = sadd.s32 %s73, 1
      %p77 = scmp.eq.s32.totalorder %s18, 4
      %p78 = scmp.ne.s32.totalorder %s73, %s75
      %p79 = scmp.eq.s32.totalorder %s18, 0
      %p80 = por %p78, %p79
      %p81 = scmp.ne.s32.totalorder %s73, %s75
      %p82 = scmp.eq.s32.totalorder %s23, 4
      %p83 = por %p81, %p82
      %p84 = scmp.ne.s32.totalorder %s75, %s76
      %p85 = scmp.eq.s32.totalorder %s23, 0
      %p86 = por %p84, %p85
      %p87 = scmp.ne.s32.totalorder %s75, %s76
      %p88 = scmp.eq.s32.totalorder %s24, 4
      %p89 = por %p87, %p88
      %p91 = scmp.ne.s32.totalorder %s76, %s90
      %p92 = scmp.eq.s32.totalorder %s24, 0
      %p93 = por %p91, %p92
      %s95 = sadd.s32 %s94, 1
      %p98 = scmp.eq.s32.totalorder %s18, 4
      %p99 = scmp.ne.s32.totalorder %s94, %s96
      %p100 = scmp.eq.s32.totalorder %s18, 0
      %p101 = por %p99, %p100
      %p102 = scmp.ne.s32.totalorder %s94, %s96
      %p103 = scmp.eq.s32.totalorder %s23, 4
      %p104 = por %p102, %p103
      %p105 = scmp.ne.s32.totalorder %s96, %s97
      %p106 = scmp.eq.s32.totalorder %s23, 0
      %p107 = por %p105, %p106
      %p108 = scmp.ne.s32.totalorder %s96, %s97
      %p109 = scmp.eq.s32.totalorder %s24, 4
      %p110 = por %p108, %p109
      %p112 = scmp.ne.s32.totalorder %s97, %s111
      %p113 = scmp.eq.s32.totalorder %s24, 0
      %p114 = por %p112, %p113
      %s115 = ssub.s32 %s18, %s25
      %p116 = scmp.eq.s32.totalorder %s115, 0
      %s118 = sadd.s32 %s117, 1
      %s119 = scalar_select %p116, %s117, %s118
      %p122 = pneg %p116
      %p123 = scmp.eq.s32.totalorder %s18, 4
      %p124 = por %p122, %p123
      %p125 = scmp.ne.s32.totalorder %s117, %s120
      %p126 = scmp.eq.s32.totalorder %s18, 0
      %p127 = por %p125, %p126
      %p128 = scmp.ne.s32.totalorder %s117, %s120
      %p129 = scmp.eq.s32.totalorder %s23, 4
      %p130 = por %p128, %p129
      %p131 = scmp.ne.s32.totalorder %s120, %s121
      %p132 = scmp.eq.s32.totalorder %s23, 0
      %p133 = por %p131, %p132
      %p134 = scmp.ne.s32.totalorder %s120, %s121
      %p135 = scmp.eq.s32.totalorder %s24, 4
      %p136 = por %p134, %p135
      %p138 = scmp.ne.s32.totalorder %s121, %s137
      %p139 = scmp.eq.s32.totalorder %s24, 0
      %p140 = por %p138, %p139
      %p141 = scmp.le.s32.totalorder 1, %s18
      %p142 = scmp.lt.s32.totalorder %s18, 6
      %p143 = pnand %p141, %p142
      %p144 = pneg %p143
      // Predicated region
      $region9: #{tpu_custom_call.1} parent=5 // pred_check
        _
      $region10: #{tpu_custom_call.1} parent=5 // pred_check_branch
        %146 = sbr.rel (%p143) target = $region12
      $region11: #{tpu_custom_call.1} parent=5 // pred_region
        %s147 = ssub.s32 %s18, 1
        // Predicated region
        $region13: #{tpu_custom_call.1} parent=11 // pred_check
          %p148 = pneg %p65
        $region14: #{tpu_custom_call.1} parent=11 // pred_check_branch
          %150 = sbr.rel (%p148) target = $region16
        $region15: #{tpu_custom_call.1} parent=11 // pred_region
          %s152 = ssub.s32 16, 16
          %153 = vsyncadd [#allocation6], %s152
          %s155 = sshll.u32 [#allocation5], 4
          %s156 = int_to_ptr.vmem [resolvable:$true] %s155
          %158 = dma.hbm_to_vmem [thread:$0]  %s1, 16, %s156, [#allocation6]
        $region16: #{tpu_custom_call.1} parent=11 // pred_fallthru
          _
        // Predicated region
        $region17: #{tpu_custom_call.1} parent=11 // pred_check
          %p159 = pneg %p86
        $region18: #{tpu_custom_call.1} parent=11 // pred_check_branch
          %161 = sbr.rel (%p159) target = $region20
        $region19: #{tpu_custom_call.1} parent=11 // pred_region
          %s163 = ssub.s32 16, 16
          %164 = vsyncadd [#allocation6], %s163
          %s166 = sshll.u32 [#allocation7], 4
          %s167 = int_to_ptr.vmem [resolvable:$true] %s166
          %169 = dma.hbm_to_vmem [thread:$0]  %s2, 16, %s167, [#allocation6]
        $region20: #{tpu_custom_call.1} parent=11 // pred_fallthru
          _
        // Predicated region
        $region21: #{tpu_custom_call.1} parent=11 // pred_check
          %p170 = pneg %p107
        $region22: #{tpu_custom_call.1} parent=11 // pred_check_branch
          %172 = sbr.rel (%p170) target = $region24
        $region23: #{tpu_custom_call.1} parent=11 // pred_region
          %s174 = ssub.s32 1024, 1024
          %175 = vsyncadd [#allocation9], %s174
          %s176 = sshll.u32 [#allocation8], 4
          %s177 = int_to_ptr.vmem [resolvable:$true] %s176
          %182 = dma.hbm_to_vmem [thread:$0]  %s3, 1024, %s177, [#allocation9], 64, 64, 4
        $region24: #{tpu_custom_call.1} parent=11 // pred_fallthru
          _
      $region12: #{tpu_custom_call.1} parent=5 // pred_fallthru
        _
      %p183 = scmp.lt.s32.totalorder %s18, 5
      // Predicated region
      $region25: #{tpu_custom_call.1} parent=5 // pred_check
        %p184 = pneg %p183
      $region26: #{tpu_custom_call.1} parent=5 // pred_check_branch
        %186 = sbr.rel (%p184) target = $region28
      $region27: #{tpu_custom_call.1} parent=5 // pred_region
        // Predicated region
        $region29: #{tpu_custom_call.1} parent=27 // pred_check
          %p187 = pneg %p38
        $region30: #{tpu_custom_call.1} parent=27 // pred_check_branch
          %189 = sbr.rel (%p187) target = $region32
        $region31: #{tpu_custom_call.1} parent=27 // pred_region
          %s190 = sand.u32 %s28, 1
          %s191 = scalar_lea.sflag [#allocation3], %s190
          %s192 = sand.u32 %s28, 1
          %s193 = smul.addr %s192, 8
          %s194 = scalar_lea.vmem [#allocation2], %s193
          %s196 = ssub.s32 128, 128
          %197 = vsyncadd %s191, %s196
          %s198 = smul.addr %s18, 128
          %s199 = scalar_lea.hbm %s0, %s198
          %s201 = sshll.u32 %s194, 4
          %s202 = int_to_ptr.vmem [resolvable:$true] %s201
          %204 = dma.hbm_to_vmem [thread:$0]  %s199, 128, %s202, %s191
        $region32: #{tpu_custom_call.1} parent=27 // pred_fallthru
          _
      $region28: #{tpu_custom_call.1} parent=5 // pred_fallthru
        _
      %p205 = scmp.le.s32.totalorder 1, %s18
      %p206 = scmp.lt.s32.totalorder %s18, 6
      %p207 = pnand %p205, %p206
      %p208 = pneg %p207
      // Predicated region
      $region33: #{tpu_custom_call.1} parent=5 // pred_check
        _
      $region34: #{tpu_custom_call.1} parent=5 // pred_check_branch
        %210 = sbr.rel (%p207) target = $region36
      $region35: #{tpu_custom_call.1} parent=5 // pred_region
        %s211 = ssub.s32 %s18, 1
        %s212 = sand.u32 %s31, 1
        %s213 = scalar_lea.sflag [#allocation3], %s212
        %s214 = sand.u32 %s31, 1
        %s215 = smul.addr %s214, 8
        %s216 = scalar_lea.vmem [#allocation2], %s215
        // Predicated region
        $region37: #{tpu_custom_call.1} parent=35 // pred_check
          %p217 = pneg %p44
        $region38: #{tpu_custom_call.1} parent=35 // pred_check_branch
          %219 = sbr.rel (%p217) target = $region40
        $region39: #{tpu_custom_call.1} parent=35 // pred_region
          %220 = dma.done %s213, 128
        $region40: #{tpu_custom_call.1} parent=35 // pred_fallthru
          _
        // Predicated region
        $region41: #{tpu_custom_call.1} parent=35 // pred_check
          %p221 = pneg %p65
        $region42: #{tpu_custom_call.1} parent=35 // pred_check_branch
          %223 = sbr.rel (%p221) target = $region44
        $region43: #{tpu_custom_call.1} parent=35 // pred_region
          %224 = dma.done [#allocation6], 16
        $region44: #{tpu_custom_call.1} parent=35 // pred_fallthru
          _
        // Predicated region
        $region45: #{tpu_custom_call.1} parent=35 // pred_check
          %p225 = pneg %p86
        $region46: #{tpu_custom_call.1} parent=35 // pred_check_branch
          %227 = sbr.rel (%p225) target = $region48
        $region47: #{tpu_custom_call.1} parent=35 // pred_region
          %228 = dma.done [#allocation6], 16
        $region48: #{tpu_custom_call.1} parent=35 // pred_fallthru
          _
        // Predicated region
        $region49: #{tpu_custom_call.1} parent=35 // pred_check
          %p229 = pneg %p107
        $region50: #{tpu_custom_call.1} parent=35 // pred_check_branch
          %231 = sbr.rel (%p229) target = $region52
        $region51: #{tpu_custom_call.1} parent=35 // pred_region
          %232 = dma.done [#allocation9], 1024
        $region52: #{tpu_custom_call.1} parent=35 // pred_fallthru
          _
        %s233 = sand.u32 %s31, 1
        %s234 = scalar_lea.sflag [#allocation3], %s233
        %s235 = sand.u32 %s31, 1
        %s236 = smul.addr %s235, 8
        %s237 = scalar_lea.vmem [#allocation2], %s236
        %p238 = pneg %p44
        %p239 = pneg %p41
        %p240 = pneg %p65
        %p241 = pneg %p62
        %p242 = pneg %p86
        %p243 = pneg %p83
        %p244 = pneg %p107
        %p245 = pneg %p104
        %p246 = pneg %p133
        %p247 = pneg %p130
        %s248 = sand.u32 %s120, 1
        %s249 = scalar_lea.sflag [#allocation4], %s248
        %s250 = sand.u32 %s120, 1
        %s251 = smul.addr %s250, 8
        %s252 = scalar_lea.vmem [#allocation10], %s251
        %v254 = vld [vmem:[%s216] sm:$0xff]
        %v255 = vld [vmem:[#allocation8] sm:$0xf]
        %v256 = vld [vmem:[#allocation8 + $0x4] sm:$0xf]
        %v257 = vld [vmem:[#allocation8 + $0x8] sm:$0xf]
        %v258 = vld [vmem:[#allocation8 + $0xc] sm:$0xf]
        %v259 = vld [vmem:[#allocation8 + $0x10] sm:$0xf]
        %v260 = vld [vmem:[#allocation8 + $0x14] sm:$0xf]
        %v261 = vld [vmem:[#allocation8 + $0x18] sm:$0xf]
        %v262 = vld [vmem:[#allocation8 + $0x1c] sm:$0xf]
        %v263 = vld [vmem:[#allocation8 + $0x20] sm:$0xf]
        %v264 = vld [vmem:[#allocation8 + $0x24] sm:$0xf]
        %v265 = vld [vmem:[#allocation8 + $0x28] sm:$0xf]
        %v266 = vld [vmem:[#allocation8 + $0x2c] sm:$0xf]
        %v267 = vld [vmem:[#allocation8 + $0x30] sm:$0xf]
        %v268 = vld [vmem:[#allocation8 + $0x34] sm:$0xf]
        %v269 = vld [vmem:[#allocation8 + $0x38] sm:$0xf]
        %v270 = vld [vmem:[#allocation8 + $0x3c] sm:$0xf]
        %v271 = vpack.c.bf16 %v254, %v254
        %v272 = vunpack.c.l.bf16 %v271
        %v273 = vsub.f32 %v254, %v272
        %v274 = vpack.c.bf16 %v273, %v273
        %v291 = vunpack.c.l.b16 %v255
        %v292 = vunpack.c.l.b16 %v256
        %v293 = vunpack.c.l.b16 %v257
        %v294 = vunpack.c.l.b16 %v258
        %v295 = vunpack.c.l.b16 %v259
        %v296 = vunpack.c.l.b16 %v260
        %v297 = vunpack.c.l.b16 %v261
        %v298 = vunpack.c.l.b16 %v262
        %v299 = vunpack.c.l.b16 %v263
        %v300 = vunpack.c.l.b16 %v264
        %v301 = vunpack.c.l.b16 %v265
        %v302 = vunpack.c.l.b16 %v266
        %v303 = vunpack.c.l.b16 %v267
        %v304 = vunpack.c.l.b16 %v268
        %v305 = vunpack.c.l.b16 %v269
        %v306 = vunpack.c.l.b16 %v270
        %v307 = vpack.c.b16 %v292, %v291
        %v308 = vpack.c.b16 %v294, %v293
        %v309 = vpack.c.b16 %v296, %v295
        %v310 = vpack.c.b16 %v298, %v297
        %v311 = vpack.c.b16 %v300, %v299
        %v312 = vpack.c.b16 %v302, %v301
        %v313 = vpack.c.b16 %v304, %v303
        %v314 = vpack.c.b16 %v306, %v305
        %323 = vmatprep.subr.bf16.mxu0 0
        %324 = vmatpush1.bf16.msra.mxu0 %v307
        %325 = vmatprep.subr.bf16.mxu0 0
        %326 = vmatpush1.bf16.msra.mxu0 %v308
        %327 = vmatprep.subr.bf16.mxu0 0
        %328 = vmatpush1.bf16.msra.mxu0 %v309
        %329 = vmatprep.subr.bf16.mxu0 0
        %330 = vmatpush1.bf16.msra.mxu0 %v310
        %331 = vmatprep.subr.bf16.mxu0 0
        %332 = vmatpush1.bf16.msra.mxu0 %v311
        %333 = vmatprep.subr.bf16.mxu0 0
        %334 = vmatpush1.bf16.msra.mxu0 %v312
        %335 = vmatprep.subr.bf16.mxu0 0
        %336 = vmatpush1.bf16.msra.mxu0 %v313
        %337 = vmatprep.subr.bf16.mxu0 0
        %338 = vmatpush1.bf16.msra.mxu0 %v314
        %339 = vmatprep.subr.bf16.mxu0 0
        %340 = vmatpush1.bf16.msra.mxu0 0
        %341 = vmatprep.subr.bf16.mxu0 0
        %342 = vmatpush1.bf16.msra.mxu0 0
        %343 = vmatprep.subr.bf16.mxu0 0
        %344 = vmatpush1.bf16.msra.mxu0 0
        %345 = vmatprep.subr.bf16.mxu0 0
        %346 = vmatpush1.bf16.msra.mxu0 0
        %347 = vmatprep.subr.bf16.mxu0 0
        %348 = vmatpush1.bf16.msra.mxu0 0
        %349 = vmatprep.subr.bf16.mxu0 0
        %350 = vmatpush1.bf16.msra.mxu0 0
        %351 = vmatprep.subr.bf16.mxu0 0
        %352 = vmatpush1.bf16.msra.mxu0 0
        %353 = vmatprep.subr.bf16.mxu0 0
        %354 = vmatpush1.bf16.msra.mxu0 0
        %355 = vmatprep.mubr.bf16.mxu0 0
        %356 = vmatmul.mubr.bf16.gmra.mrb[0].mxu0 %v274
        %v357 = vpop.f32.mrb[0].mxu0
        %v358 = vadd.f32 0.0, %v357
        %v359 = vpop.f32.mrb[0].mxu0
        %v360 = vpop.f32.mrb[0].mxu0
        %v361 = vpop.f32.mrb[0].mxu0
        %362 = vdwg.mxu0
        %363 = vmatprep.subr.bf16.mxu0 0
        %364 = vmatpush1.bf16.msra.mxu0 %v307
        %365 = vmatprep.subr.bf16.mxu0 0
        %366 = vmatpush1.bf16.msra.mxu0 %v308
        %367 = vmatprep.subr.bf16.mxu0 0
        %368 = vmatpush1.bf16.msra.mxu0 %v309
        %369 = vmatprep.subr.bf16.mxu0 0
        %370 = vmatpush1.bf16.msra.mxu0 %v310
        %371 = vmatprep.subr.bf16.mxu0 0
        %372 = vmatpush1.bf16.msra.mxu0 %v311
        %373 = vmatprep.subr.bf16.mxu0 0
        %374 = vmatpush1.bf16.msra.mxu0 %v312
        %375 = vmatprep.subr.bf16.mxu0 0
        %376 = vmatpush1.bf16.msra.mxu0 %v313
        %377 = vmatprep.subr.bf16.mxu0 0
        %378 = vmatpush1.bf16.msra.mxu0 %v314
        %379 = vmatprep.subr.bf16.mxu0 0
        %380 = vmatpush1.bf16.msra.mxu0 0
        %381 = vmatprep.subr.bf16.mxu0 0
        %382 = vmatpush1.bf16.msra.mxu0 0
        %383 = vmatprep.subr.bf16.mxu0 0
        %384 = vmatpush1.bf16.msra.mxu0 0
        %385 = vmatprep.subr.bf16.mxu0 0
        %386 = vmatpush1.bf16.msra.mxu0 0
        %387 = vmatprep.subr.bf16.mxu0 0
        %388 = vmatpush1.bf16.msra.mxu0 0
        %389 = vmatprep.subr.bf16.mxu0 0
        %390 = vmatpush1.bf16.msra.mxu0 0
        %391 = vmatprep.subr.bf16.mxu0 0
        %392 = vmatpush1.bf16.msra.mxu0 0
        %393 = vmatprep.subr.bf16.mxu0 0
        %394 = vmatpush1.bf16.msra.mxu0 0
        %395 = vmatprep.mubr.bf16.mxu0 0
        %396 = vmatmul.mubr.bf16.gmra.mrb[0].mxu0 %v271
        %v397 = vpop.f32.mrb[0].mxu0
        %v398 = vadd.f32 %v358, %v397
        %v399 = vpop.f32.mrb[0].mxu0
        %v400 = vpop.f32.mrb[0].mxu0
        %v401 = vpop.f32.mrb[0].mxu0
        %402 = vdwg.mxu0
        %v403 = vmul.f32 %v398, 0.03125
        %v404 = vsub.f32 %v254, %v403
        %v405 = vmul.f32 %v404, %v404
        %v406 = vpack.c.bf16 %v405, %v405
        %v407 = vunpack.c.l.bf16 %v406
        %v408 = vsub.f32 %v405, %v407
        %v409 = vpack.c.bf16 %v408, %v408
        %410 = vmatprep.subr.bf16.mxu0 0
        %411 = vmatpush1.bf16.msra.mxu0 %v307
        %412 = vmatprep.subr.bf16.mxu0 0
        %413 = vmatpush1.bf16.msra.mxu0 %v308
        %414 = vmatprep.subr.bf16.mxu0 0
        %415 = vmatpush1.bf16.msra.mxu0 %v309
        %416 = vmatprep.subr.bf16.mxu0 0
        %417 = vmatpush1.bf16.msra.mxu0 %v310
        %418 = vmatprep.subr.bf16.mxu0 0
        %419 = vmatpush1.bf16.msra.mxu0 %v311
        %420 = vmatprep.subr.bf16.mxu0 0
        %421 = vmatpush1.bf16.msra.mxu0 %v312
        %422 = vmatprep.subr.bf16.mxu0 0
        %423 = vmatpush1.bf16.msra.mxu0 %v313
        %424 = vmatprep.subr.bf16.mxu0 0
        %425 = vmatpush1.bf16.msra.mxu0 %v314
        %426 = vmatprep.subr.bf16.mxu0 0
        %427 = vmatpush1.bf16.msra.mxu0 0
        %428 = vmatprep.subr.bf16.mxu0 0
        %429 = vmatpush1.bf16.msra.mxu0 0
        %430 = vmatprep.subr.bf16.mxu0 0
        %431 = vmatpush1.bf16.msra.mxu0 0
        %432 = vmatprep.subr.bf16.mxu0 0
        %433 = vmatpush1.bf16.msra.mxu0 0
        %434 = vmatprep.subr.bf16.mxu0 0
        %435 = vmatpush1.bf16.msra.mxu0 0
        %436 = vmatprep.subr.bf16.mxu0 0
        %437 = vmatpush1.bf16.msra.mxu0 0
        %438 = vmatprep.subr.bf16.mxu0 0
        %439 = vmatpush1.bf16.msra.mxu0 0
        %440 = vmatprep.subr.bf16.mxu0 0
        %441 = vmatpush1.bf16.msra.mxu0 0
        %442 = vmatprep.mubr.bf16.mxu0 0
        %443 = vmatmul.mubr.bf16.gmra.mrb[0].mxu0 %v409
        %v444 = vpop.f32.mrb[0].mxu0
        %v445 = vadd.f32 0.0, %v444
        %v446 = vpop.f32.mrb[0].mxu0
        %v447 = vpop.f32.mrb[0].mxu0
        %v448 = vpop.f32.mrb[0].mxu0
        %449 = vdwg.mxu0
        %450 = vmatprep.subr.bf16.mxu0 0
        %451 = vmatpush1.bf16.msra.mxu0 %v307
        %452 = vmatprep.subr.bf16.mxu0 0
        %453 = vmatpush1.bf16.msra.mxu0 %v308
        %454 = vmatprep.subr.bf16.mxu0 0
        %455 = vmatpush1.bf16.msra.mxu0 %v309
        %456 = vmatprep.subr.bf16.mxu0 0
        %457 = vmatpush1.bf16.msra.mxu0 %v310
        %458 = vmatprep.subr.bf16.mxu0 0
        %459 = vmatpush1.bf16.msra.mxu0 %v311
        %460 = vmatprep.subr.bf16.mxu0 0
        %461 = vmatpush1.bf16.msra.mxu0 %v312
        %462 = vmatprep.subr.bf16.mxu0 0
        %463 = vmatpush1.bf16.msra.mxu0 %v313
        %464 = vmatprep.subr.bf16.mxu0 0
        %465 = vmatpush1.bf16.msra.mxu0 %v314
        %466 = vmatprep.subr.bf16.mxu0 0
        %467 = vmatpush1.bf16.msra.mxu0 0
        %468 = vmatprep.subr.bf16.mxu0 0
        %469 = vmatpush1.bf16.msra.mxu0 0
        %470 = vmatprep.subr.bf16.mxu0 0
        %471 = vmatpush1.bf16.msra.mxu0 0
        %472 = vmatprep.subr.bf16.mxu0 0
        %473 = vmatpush1.bf16.msra.mxu0 0
        %474 = vmatprep.subr.bf16.mxu0 0
        %475 = vmatpush1.bf16.msra.mxu0 0
        %476 = vmatprep.subr.bf16.mxu0 0
        %477 = vmatpush1.bf16.msra.mxu0 0
        %478 = vmatprep.subr.bf16.mxu0 0
        %479 = vmatpush1.bf16.msra.mxu0 0
        %480 = vmatprep.subr.bf16.mxu0 0
        %481 = vmatpush1.bf16.msra.mxu0 0
        %482 = vmatprep.mubr.bf16.mxu0 0
        %483 = vmatmul.mubr.bf16.gmra.mrb[0].mxu0 %v406
        %v484 = vpop.f32.mrb[0].mxu0
        %v485 = vadd.f32 %v445, %v484
        %v486 = vpop.f32.mrb[0].mxu0
        %v487 = vpop.f32.mrb[0].mxu0
        %v488 = vpop.f32.mrb[0].mxu0
        %489 = vdwg.mxu0
        %v490 = vmul.f32 %v485, 0.03125
        %v491 = vadd.f32 %v490, 1e-05
        %v492 = vrsqrt.pop %v491
        %v493 = vmul.f32 %v404, %v492
        %v494 = vld [vmem:[#allocation5] sm:$0x1]
        %v496 = vlaneseq
        %v497 = vshrl.u32 %v496, 7
        %v498 = vsub.s32 0, %v497
        %v499 = vrot.slane %v494, %v498
        %v501 = vmul.f32 %v493, %v499
        %v502 = vld [vmem:[#allocation7] sm:$0x1]
        %v504 = vlaneseq
        %v505 = vshrl.u32 %v504, 7
        %v506 = vsub.s32 0, %v505
        %v507 = vrot.slane %v502, %v506
        %v509 = vadd.f32 %v501, %v507
        %510 = vst [vmem:[%s252] sm:$0xff] %v509
        %s511 = sand.u32 %s120, 1
        %s512 = scalar_lea.sflag [#allocation4], %s511
        %s513 = sand.u32 %s120, 1
        %s514 = smul.addr %s513, 8
        %s515 = scalar_lea.vmem [#allocation10], %s514
        // Predicated region
        $region53: #{tpu_custom_call.1} parent=35 // pred_check
          %p516 = pneg %p130
        $region54: #{tpu_custom_call.1} parent=35 // pred_check_branch
          %518 = sbr.rel (%p516) target = $region56
        $region55: #{tpu_custom_call.1} parent=35 // pred_region
          %s520 = ssub.s32 128, 128
          %521 = vsyncadd %s512, %s520
          %s522 = smul.addr %s23, 128
          %s523 = scalar_lea.hbm %s4, %s522
          %s525 = sshll.u32 %s515, 4
          %s526 = int_to_ptr.vmem [resolvable:$true] %s525
          %528 = dma.vmem_to_hbm [thread:$0]  %s526, 128, %s523, %s512
        $region56: #{tpu_custom_call.1} parent=35 // pred_fallthru
          _
      $region36: #{tpu_custom_call.1} parent=5 // pred_fallthru
        _
      %p529 = scmp.le.s32.totalorder 2, %s18
      // Predicated region
      $region57: #{tpu_custom_call.1} parent=5 // pred_check
        %p530 = pneg %p529
      $region58: #{tpu_custom_call.1} parent=5 // pred_check_branch
        %532 = sbr.rel (%p530) target = $region60
      $region59: #{tpu_custom_call.1} parent=5 // pred_region
        %s533 = ssub.s32 %s18, 2
        // Predicated region
        $region61: #{tpu_custom_call.1} parent=59 // pred_check
          %p534 = pneg %p136
        $region62: #{tpu_custom_call.1} parent=59 // pred_check_branch
          %536 = sbr.rel (%p534) target = $region64
        $region63: #{tpu_custom_call.1} parent=59 // pred_region
          %s537 = sand.u32 %s121, 1
          %s538 = scalar_lea.sflag [#allocation4], %s537
          %s539 = sand.u32 %s121, 1
          %s540 = smul.addr %s539, 8
          %s541 = scalar_lea.vmem [#allocation10], %s540
          %542 = dma.done %s538, 128
        $region64: #{tpu_custom_call.1} parent=59 // pred_fallthru
          _
      $region60: #{tpu_custom_call.1} parent=5 // pred_fallthru
        _
    $region6: #{tpu_custom_call.1} parent=1 // loop_footer
      %s22 = sadd.s32 1, %s18
    $region7: #{tpu_custom_call.1} parent=1 // loop_footer_branch
      %17 = sbr.rel target = $region3
    $region8: #{tpu_custom_call.1} parent=1 // loop_exit
      _
    %543 = vsyncpa [#allocation3], 1
    %s544 = scalar_lea.sflag [#allocation3], 1
    %545 = vsyncpa %s544, 1
    %546 = vsyncpa [#allocation6], 1
    %547 = vsyncpa [#allocation9], 1
    %548 = vsyncpa [#allocation4], 1
    %s549 = scalar_lea.sflag [#allocation4], 1
    %550 = vsyncpa %s549, 1

</llo_original>
